<compile_context>
chip_gen: v6e
topology: v6e:2x2x1
jax: 0.10.0
libtpu: 0.0.40
codegen_flags: <defaults>
</compile_context>

<pallas_src>
import functools

import jax
import jax.numpy as jnp
from jax.experimental import pallas as pl
from jax.experimental.pallas import tpu as pltpu  # noqa: F401  (kept for extensions)


def _round_up(x, m):
    return ((x + m - 1) // m) * m


def _interval_mlp_kernel(x_ref, *refs, m, relu_flags):
    """Fused interval propagation through a chain of Linear(+ReLU) layers.

    x_ref holds the stacked activations [x_lower; x_upper] of shape (2M, K).
    refs = (w0, b0, w1, b1, ..., out_ref).
    """
    num_layers = len(relu_flags)
    out_ref = refs[-1]

    x = x_ref[...]                                   # (2M, K) stacked lo/up
    for li in range(num_layers):
        w = refs[2 * li][...]                        # (K, N)
        b = refs[2 * li + 1][...]                    # (1, N), broadcasts over rows
        w_pos = jnp.maximum(w, 0.0)
        w_neg = jnp.minimum(w, 0.0)

        # Stacked-LHS: one pair of matmuls covers both bounds (halves MXU work).
        p = jnp.dot(x, w_pos, preferred_element_type=jnp.float32)   # (2M, N)
        n = jnp.dot(x, w_neg, preferred_element_type=jnp.float32)   # (2M, N)

        lo = p[:m, :] + n[m:, :] + b                 # xl@W+ + xu@W- + b
        up = p[m:, :] + n[:m, :] + b                 # xu@W+ + xl@W- + b

        if relu_flags[li]:                           # fused IntervalReLU
            lo = jnp.maximum(lo, 0.0)
            up = jnp.maximum(up, 0.0)

        x = jnp.concatenate([lo, up], axis=0)        # re-stack for next layer

    out_ref[...] = x                                 # lane-dense (2M, N_pad) store


def interval_mlp(x_lower, x_upper, weights, biases, relu_flags):
    """Run the fused kernel. Small shapes -> whole arrays as single blocks."""
    M, K0 = x_lower.shape
    n_last = weights[-1].shape[1]                    # already padded to x128

    # One stacked LHS for both bounds (single XLA concat at forward entry).
    x_stacked = jnp.concatenate([x_lower, x_upper], axis=0)   # (2M, K0)

    in_specs = [pl.BlockSpec((2 * M, K0), lambda: (0, 0))]
    operands = [x_stacked]
    for w, b in zip(weights, biases):
        in_specs.append(pl.BlockSpec(w.shape, lambda: (0, 0)))
        in_specs.append(pl.BlockSpec(b.shape, lambda: (0, 0)))
        operands.append(w)
        operands.append(b)

    kernel = functools.partial(_interval_mlp_kernel, m=M,
                               relu_flags=tuple(relu_flags))
    out = pl.pallas_call(
        kernel,
        out_shape=jax.ShapeDtypeStruct((2 * M, n_last), jnp.float32),
        grid=(),
        in_specs=in_specs,
        out_specs=pl.BlockSpec((2 * M, n_last), lambda: (0, 0)),
    )(*operands)
    return out


class IntervalModelJAX:
    """Equivalent of IntervalModel wrapping a Sequential(Linear, ReLU, Linear)."""

    def __init__(self, layers):
        # layers: list of ("linear", W(in,out), b(out,)) or ("relu",)
        # Pre-process ONCE: cast to f32, reshape biases to (1, N), fold ReLUs
        # into the preceding linear, pad the last layer to a lane-dense width.
        self.leading_relus = 0
        self.linears = []           # list of [W(K,N) f32, b(1,N) f32, relu_flag]

        i, n = 0, len(layers)
        while i < n and layers[i][0] == "relu":      # standalone leading ReLUs
            self.leading_relus += 1
            i += 1
        while i < n:
            layer = layers[i]
            if layer[0] == "linear":
                W = jnp.asarray(layer[1], dtype=jnp.float32)
                b = jnp.asarray(layer[2], dtype=jnp.float32).reshape(1, -1)
                i += 1
                relu = False
                while i < n and layers[i][0] == "relu":   # fuse trailing ReLU(s)
                    relu = True
                    i += 1
                self.linears.append([W, b, relu])
            else:
                raise NotImplementedError("Not implemented")

        self.out_features = self.linears[-1][0].shape[1] if self.linears else None
        if self.linears:
            # Pad final output dim to a multiple of 128 -> unmasked vector stores.
            W, b, relu = self.linears[-1]
            n_pad = _round_up(self.out_features, 128)
            if n_pad != self.out_features:
                W = jnp.pad(W, ((0, 0), (0, n_pad - self.out_features)))
                b = jnp.pad(b, ((0, 0), (0, n_pad - self.out_features)))
                self.linears[-1] = [W, b, relu]

    def forward(self, x_lower, x_upper):
        assert x_lower.shape == x_upper.shape
        if x_lower.ndim == 4:
            b, c, h, w = x_lower.shape
            x_lower = x_lower.reshape(b, c * h * w)
            x_upper = x_upper.reshape(b, c * h * w)

        x_lower = x_lower.astype(jnp.float32)
        x_upper = x_upper.astype(jnp.float32)
        if self.leading_relus:
            x_lower = jnp.maximum(x_lower, 0.0)
            x_upper = jnp.maximum(x_upper, 0.0)
        if not self.linears:
            return x_lower, x_upper

        M = x_lower.shape[0]
        weights = [w for w, _, _ in self.linears]
        biases = [bb for _, bb, _ in self.linears]
        relu_flags = [r for _, _, r in self.linears]

        out = interval_mlp(x_lower, x_upper, weights, biases, relu_flags)
        lo = out[:M, : self.out_features]
        up = out[M:, : self.out_features]
        return lo, up


def _reference_forward(layers, x_lower, x_upper):
    """Plain-JAX reference matching the PyTorch semantics exactly."""
    if x_lower.ndim == 4:
        b, c, h, w = x_lower.shape
        x_lower = x_lower.reshape(b, c * h * w)
        x_upper = x_upper.reshape(b, c * h * w)
    lo, up = x_lower.astype(jnp.float32), x_upper.astype(jnp.float32)
    for layer in layers:
        if layer[0] == "linear":
            W = jnp.asarray(layer[1], jnp.float32)
            bias = jnp.asarray(layer[2], jnp.float32)
            Wp = jnp.maximum(W, 0.0)
            Wn = jnp.minimum(W, 0.0)
            new_lo = lo @ Wp + up @ Wn + bias
            new_up = up @ Wp + lo @ Wn + bias
            lo, up = new_lo, new_up
        elif layer[0] == "relu":
            lo, up = jnp.maximum(lo, 0.0), jnp.maximum(up, 0.0)
        else:
            raise NotImplementedError("Not implemented")
    return lo, up


if __name__ == "__main__":
    key = jax.random.PRNGKey(0)
    k_in, k_eps, k_w1, k_b1, k_w2, k_b2 = jax.random.split(key, 6)

    # Input: NCHW (batch=2, channels=4, spatial=16x16) -> flattened to (2, 1024)
    B, C, H, W = 2, 4, 16, 16
    in_features = C * H * W
    hidden = 32
    out_features = 10

    x = jax.random.normal(k_in, (B, C, H, W), dtype=jnp.float32)
    eps = 0.1
    x_lower = x - eps
    x_upper = x + eps

    # Deterministic "Sequential(Linear(1024,32), ReLU(), Linear(32,10))" params.
    # Stored already transposed: W has shape (in_features, out_features) = weight.t()
    W1 = jax.random.normal(k_w1, (in_features, hidden), dtype=jnp.float32) * 0.05
    b1 = jax.random.normal(k_b1, (hidden,), dtype=jnp.float32) * 0.05
    W2 = jax.random.normal(k_w2, (hidden, out_features), dtype=jnp.float32) * 0.05
    b2 = jax.random.normal(k_b2, (out_features,), dtype=jnp.float32) * 0.05

    layers = [("linear", W1, b1), ("relu",), ("linear", W2, b2)]
    model = IntervalModelJAX(layers)

    lo, up = model.forward(x_lower, x_upper)
    jax.block_until_ready((lo, up))

    # sanity check vs plain-JAX reference
    ref_lo, ref_up = _reference_forward(layers, x_lower, x_upper)
    assert lo.shape == (B, out_features) and up.shape == (B, out_features)
    assert jnp.allclose(lo, ref_lo, atol=1e-4, rtol=1e-4)
    assert jnp.allclose(up, ref_up, atol=1e-4, rtol=1e-4)
    assert bool(jnp.all(up >= lo))

    print("KERNEL_OK")
</pallas_src>

<mosaic_0001>
module attributes {stable_mosaic.version = 11 : i64} {
  func.func @_interval_mlp_kernel(%arg0: memref<4x1024xf32, #tpu.memory_space<vmem>>, %arg1: memref<1024x32xf32, #tpu.memory_space<vmem>>, %arg2: memref<1x32xf32, #tpu.memory_space<vmem>>, %arg3: memref<32x128xf32, #tpu.memory_space<vmem>>, %arg4: memref<1x128xf32, #tpu.memory_space<vmem>>, %arg5: memref<4x128xf32, #tpu.memory_space<vmem>>) attributes {dimension_semantics = [], scalar_prefetch = 0 : i64, scratch_operands = 0 : i64, tpu.core_type = #tpu.core_type<tc>} {
    %c0 = arith.constant 0 : index
    %c0_0 = arith.constant 0 : index
    %0 = vector.load %arg0[%c0, %c0_0] : memref<4x1024xf32, #tpu.memory_space<vmem>>, vector<4x1024xf32>
    %c0_1 = arith.constant 0 : index
    %c0_2 = arith.constant 0 : index
    %1 = vector.load %arg1[%c0_1, %c0_2] : memref<1024x32xf32, #tpu.memory_space<vmem>>, vector<1024x32xf32>
    %c0_3 = arith.constant 0 : index
    %c0_4 = arith.constant 0 : index
    %2 = vector.load %arg2[%c0_3, %c0_4] : memref<1x32xf32, #tpu.memory_space<vmem>>, vector<1x32xf32>
    %cst = arith.constant 0.000000e+00 : f32
    %3 = vector.broadcast %cst : f32 to vector<1024x32xf32>
    %4 = arith.maximumf %1, %3 : vector<1024x32xf32>
    %cst_5 = arith.constant 0.000000e+00 : f32
    %5 = vector.broadcast %cst_5 : f32 to vector<1024x32xf32>
    %6 = arith.minimumf %1, %5 : vector<1024x32xf32>
    %cst_6 = arith.constant dense<0.000000e+00> : vector<4x32xf32>
    %7 = tpu.matmul %0, %4, %cst_6 {dimension_numbers = #tpu.dot_dimension_numbers<[1], [0], [0], [1], [0, 0, 1, 1], [], []>} : vector<4x1024xf32>, vector<1024x32xf32>, vector<4x32xf32> -> vector<4x32xf32>
    %cst_7 = arith.constant dense<0.000000e+00> : vector<4x32xf32>
    %8 = tpu.matmul %0, %6, %cst_7 {dimension_numbers = #tpu.dot_dimension_numbers<[1], [0], [0], [1], [0, 0, 1, 1], [], []>} : vector<4x1024xf32>, vector<1024x32xf32>, vector<4x32xf32> -> vector<4x32xf32>
    %9 = vector.extract_strided_slice %7 {offsets = [0, 0], sizes = [2, 32], strides = [1, 1]} : vector<4x32xf32> to vector<2x32xf32>
    %10 = vector.extract_strided_slice %8 {offsets = [2, 0], sizes = [2, 32], strides = [1, 1]} : vector<4x32xf32> to vector<2x32xf32>
    %11 = arith.addf %9, %10 : vector<2x32xf32>
    %12 = vector.broadcast %2 : vector<1x32xf32> to vector<2x32xf32>
    %13 = arith.addf %11, %12 : vector<2x32xf32>
    %14 = vector.extract_strided_slice %7 {offsets = [2, 0], sizes = [2, 32], strides = [1, 1]} : vector<4x32xf32> to vector<2x32xf32>
    %15 = vector.extract_strided_slice %8 {offsets = [0, 0], sizes = [2, 32], strides = [1, 1]} : vector<4x32xf32> to vector<2x32xf32>
    %16 = arith.addf %14, %15 : vector<2x32xf32>
    %17 = vector.broadcast %2 : vector<1x32xf32> to vector<2x32xf32>
    %18 = arith.addf %16, %17 : vector<2x32xf32>
    %cst_8 = arith.constant 0.000000e+00 : f32
    %19 = vector.broadcast %cst_8 : f32 to vector<2x32xf32>
    %20 = arith.maximumf %13, %19 : vector<2x32xf32>
    %cst_9 = arith.constant 0.000000e+00 : f32
    %21 = vector.broadcast %cst_9 : f32 to vector<2x32xf32>
    %22 = arith.maximumf %18, %21 : vector<2x32xf32>
    %23 = tpu.concatenate %20, %22 in 0 : vector<2x32xf32>, vector<2x32xf32> -> vector<4x32xf32>
    %c0_10 = arith.constant 0 : index
    %c0_11 = arith.constant 0 : index
    %24 = vector.load %arg3[%c0_10, %c0_11] : memref<32x128xf32, #tpu.memory_space<vmem>>, vector<32x128xf32>
    %c0_12 = arith.constant 0 : index
    %c0_13 = arith.constant 0 : index
    %25 = vector.load %arg4[%c0_12, %c0_13] : memref<1x128xf32, #tpu.memory_space<vmem>>, vector<1x128xf32>
    %cst_14 = arith.constant 0.000000e+00 : f32
    %26 = vector.broadcast %cst_14 : f32 to vector<32x128xf32>
    %27 = arith.maximumf %24, %26 : vector<32x128xf32>
    %cst_15 = arith.constant 0.000000e+00 : f32
    %28 = vector.broadcast %cst_15 : f32 to vector<32x128xf32>
    %29 = arith.minimumf %24, %28 : vector<32x128xf32>
    %cst_16 = arith.constant dense<0.000000e+00> : vector<4x128xf32>
    %30 = tpu.matmul %23, %27, %cst_16 {dimension_numbers = #tpu.dot_dimension_numbers<[1], [0], [0], [1], [0, 0, 1, 1], [], []>} : vector<4x32xf32>, vector<32x128xf32>, vector<4x128xf32> -> vector<4x128xf32>
    %cst_17 = arith.constant dense<0.000000e+00> : vector<4x128xf32>
    %31 = tpu.matmul %23, %29, %cst_17 {dimension_numbers = #tpu.dot_dimension_numbers<[1], [0], [0], [1], [0, 0, 1, 1], [], []>} : vector<4x32xf32>, vector<32x128xf32>, vector<4x128xf32> -> vector<4x128xf32>
    %32 = vector.extract_strided_slice %30 {offsets = [0, 0], sizes = [2, 128], strides = [1, 1]} : vector<4x128xf32> to vector<2x128xf32>
    %33 = vector.extract_strided_slice %31 {offsets = [2, 0], sizes = [2, 128], strides = [1, 1]} : vector<4x128xf32> to vector<2x128xf32>
    %34 = arith.addf %32, %33 : vector<2x128xf32>
    %35 = vector.broadcast %25 : vector<1x128xf32> to vector<2x128xf32>
    %36 = arith.addf %34, %35 : vector<2x128xf32>
    %37 = vector.extract_strided_slice %30 {offsets = [2, 0], sizes = [2, 128], strides = [1, 1]} : vector<4x128xf32> to vector<2x128xf32>
    %38 = vector.extract_strided_slice %31 {offsets = [0, 0], sizes = [2, 128], strides = [1, 1]} : vector<4x128xf32> to vector<2x128xf32>
    %39 = arith.addf %37, %38 : vector<2x128xf32>
    %40 = vector.broadcast %25 : vector<1x128xf32> to vector<2x128xf32>
    %41 = arith.addf %39, %40 : vector<2x128xf32>
    %42 = tpu.concatenate %36, %41 in 0 : vector<2x128xf32>, vector<2x128xf32> -> vector<4x128xf32>
    %c0_18 = arith.constant 0 : index
    %c0_19 = arith.constant 0 : index
    %43 = vector.load %arg5[%c0_18, %c0_19] : memref<4x128xf32, #tpu.memory_space<vmem>>, vector<4x128xf32>
    tpu.vector_store %arg5[%c0_18, %c0_19], %42 {strides = array<i32>} : memref<4x128xf32, #tpu.memory_space<vmem>>, vector<4x128xf32>,
    return
  }
}

</mosaic_0001>

<llo_original>
// kernel: tpu_custom_call.1
$region0: #{tpu_custom_call.1}
  #allocation0 [shape = 'u32[]', space=smem, size = 0x4, offset = 0x4, fixed_abs, tag = 'smem constant byte address 0x4 - core index']
  #allocation1 [shape = 'u32[144,128]{1,0:T(1,128)}', space=vmem, size = 0x12000, scoped, tag = 'internal scratch']
  %s0 = inlined_call_operand.vmem [shape: f32[4,1024], index: 0, kind: input, shape index: {}]
  %s1 = inlined_call_operand.vmem [shape: f32[1024,32], index: 1, kind: input, shape index: {}]
  %s2 = inlined_call_operand.vmem [shape: f32[1,32], index: 2, kind: input, shape index: {}]
  %s3 = inlined_call_operand.vmem [shape: f32[32,128], index: 3, kind: input, shape index: {}]
  %s4 = inlined_call_operand.vmem [shape: f32[1,128], index: 4, kind: input, shape index: {}]
  %s5 = inlined_call_operand.hbm [shape: f32[4,128], index: 5, kind: output, shape index: {}]
  %s6 = sld [smem:[#allocation0]]
  $region30: #{tpu_custom_call.1} parent=0
    _
  %s8 = ssub.s32 1, %s6
  %s9 = scalar_select 0, %s8, %s6
  $region1: #{tpu_custom_call.1} parent=0
    #allocation2 [shape = 'u8[2048]{0}', space=vmem, size = 0x800, scoped, tag = 'output window, operand 0, single buffered']
    #allocation3 [shape = 's32[1]{0}', space=sflag, size = 0x4, scoped, tag = 'scoped memory for tpu_custom_call.1']
    %10 = vsyncpa [#allocation3], 0
    // Predicated region
    $region2: #{tpu_custom_call.1} parent=1 // pred_check
      _
    $region3: #{tpu_custom_call.1} parent=1 // pred_check_branch
      %12 = sbr.rel (0) target = $region5
    $region4: #{tpu_custom_call.1} parent=1 // pred_region
      _
    $region5: #{tpu_custom_call.1} parent=1 // pred_fallthru
      _
    // Predicated region
    $region6: #{tpu_custom_call.1} parent=1 // pred_check
      _
    $region7: #{tpu_custom_call.1} parent=1 // pred_check_branch
      %14 = sbr.rel (0) target = $region9
    $region8: #{tpu_custom_call.1} parent=1 // pred_region
      _
    $region9: #{tpu_custom_call.1} parent=1 // pred_fallthru
      _
    // Predicated region
    $region10: #{tpu_custom_call.1} parent=1 // pred_check
      _
    $region11: #{tpu_custom_call.1} parent=1 // pred_check_branch
      %16 = sbr.rel (0) target = $region13
    $region12: #{tpu_custom_call.1} parent=1 // pred_region
      _
    $region13: #{tpu_custom_call.1} parent=1 // pred_fallthru
      _
    // Predicated region
    $region14: #{tpu_custom_call.1} parent=1 // pred_check
      _
    $region15: #{tpu_custom_call.1} parent=1 // pred_check_branch
      %18 = sbr.rel (0) target = $region17
    $region16: #{tpu_custom_call.1} parent=1 // pred_region
      _
    $region17: #{tpu_custom_call.1} parent=1 // pred_fallthru
      _
    // Predicated region
    $region18: #{tpu_custom_call.1} parent=1 // pred_check
      _
    $region19: #{tpu_custom_call.1} parent=1 // pred_check_branch
      %20 = sbr.rel (0) target = $region21
    $region20: #{tpu_custom_call.1} parent=1 // pred_region
      _
    $region21: #{tpu_custom_call.1} parent=1 // pred_fallthru
      _
    %v21 = vld [vmem:[%s0] sm:$0xff]
    %v22 = vld [vmem:[%s0 + $0x8] sm:$0xff]
    %v23 = vld [vmem:[%s0 + $0x10] sm:$0xff]
    %v24 = vld [vmem:[%s0 + $0x18] sm:$0xff]
    %v25 = vld [vmem:[%s1] sm:$0xff]
    %v26 = vld [vmem:[%s1 + $0x8] sm:$0xff]
    %v27 = vld [vmem:[%s1 + $0x10] sm:$0xff]
    %v28 = vld [vmem:[%s1 + $0x18] sm:$0xff]
    %v29 = vld [vmem:[%s1 + $0x20] sm:$0xff]
    %v30 = vld [vmem:[%s1 + $0x28] sm:$0xff]
    %v31 = vld [vmem:[%s1 + $0x30] sm:$0xff]
    %v32 = vld [vmem:[%s1 + $0x38] sm:$0xff]
    %v33 = vld [vmem:[%s1 + $0x40] sm:$0xff]
    %v34 = vld [vmem:[%s1 + $0x48] sm:$0xff]
    %v35 = vld [vmem:[%s1 + $0x50] sm:$0xff]
    %v36 = vld [vmem:[%s1 + $0x58] sm:$0xff]
    %v37 = vld [vmem:[%s1 + $0x60] sm:$0xff]
    %v38 = vld [vmem:[%s1 + $0x68] sm:$0xff]
    %v39 = vld [vmem:[%s1 + $0x70] sm:$0xff]
    %v40 = vld [vmem:[%s1 + $0x78] sm:$0xff]
    %v41 = vld [vmem:[%s1 + $0x80] sm:$0xff]
    %v42 = vld [vmem:[%s1 + $0x88] sm:$0xff]
    %v43 = vld [vmem:[%s1 + $0x90] sm:$0xff]
    %v44 = vld [vmem:[%s1 + $0x98] sm:$0xff]
    %v45 = vld [vmem:[%s1 + $0xa0] sm:$0xff]
    %v46 = vld [vmem:[%s1 + $0xa8] sm:$0xff]
    %v47 = vld [vmem:[%s1 + $0xb0] sm:$0xff]
    %v48 = vld [vmem:[%s1 + $0xb8] sm:$0xff]
    %v49 = vld [vmem:[%s1 + $0xc0] sm:$0xff]
    %v50 = vld [vmem:[%s1 + $0xc8] sm:$0xff]
    %v51 = vld [vmem:[%s1 + $0xd0] sm:$0xff]
    %v52 = vld [vmem:[%s1 + $0xd8] sm:$0xff]
    %v53 = vld [vmem:[%s1 + $0xe0] sm:$0xff]
    %v54 = vld [vmem:[%s1 + $0xe8] sm:$0xff]
    %v55 = vld [vmem:[%s1 + $0xf0] sm:$0xff]
    %v56 = vld [vmem:[%s1 + $0xf8] sm:$0xff]
    %v57 = vld [vmem:[%s1 + $0x100] sm:$0xff]
    %v58 = vld [vmem:[%s1 + $0x108] sm:$0xff]
    %v59 = vld [vmem:[%s1 + $0x110] sm:$0xff]
    %v60 = vld [vmem:[%s1 + $0x118] sm:$0xff]
    %v61 = vld [vmem:[%s1 + $0x120] sm:$0xff]
    %v62 = vld [vmem:[%s1 + $0x128] sm:$0xff]
    %v63 = vld [vmem:[%s1 + $0x130] sm:$0xff]
    %v64 = vld [vmem:[%s1 + $0x138] sm:$0xff]
    %v65 = vld [vmem:[%s1 + $0x140] sm:$0xff]
    %v66 = vld [vmem:[%s1 + $0x148] sm:$0xff]
    %v67 = vld [vmem:[%s1 + $0x150] sm:$0xff]
    %v68 = vld [vmem:[%s1 + $0x158] sm:$0xff]
    %v69 = vld [vmem:[%s1 + $0x160] sm:$0xff]
    %v70 = vld [vmem:[%s1 + $0x168] sm:$0xff]
    %v71 = vld [vmem:[%s1 + $0x170] sm:$0xff]
    %v72 = vld [vmem:[%s1 + $0x178] sm:$0xff]
    %v73 = vld [vmem:[%s1 + $0x180] sm:$0xff]
    %v74 = vld [vmem:[%s1 + $0x188] sm:$0xff]
    %v75 = vld [vmem:[%s1 + $0x190] sm:$0xff]
    %v76 = vld [vmem:[%s1 + $0x198] sm:$0xff]
    %v77 = vld [vmem:[%s1 + $0x1a0] sm:$0xff]
    %v78 = vld [vmem:[%s1 + $0x1a8] sm:$0xff]
    %v79 = vld [vmem:[%s1 + $0x1b0] sm:$0xff]
    %v80 = vld [vmem:[%s1 + $0x1b8] sm:$0xff]
    %v81 = vld [vmem:[%s1 + $0x1c0] sm:$0xff]
    %v82 = vld [vmem:[%s1 + $0x1c8] sm:$0xff]
    %v83 = vld [vmem:[%s1 + $0x1d0] sm:$0xff]
    %v84 = vld [vmem:[%s1 + $0x1d8] sm:$0xff]
    %v85 = vld [vmem:[%s1 + $0x1e0] sm:$0xff]
    %v86 = vld [vmem:[%s1 + $0x1e8] sm:$0xff]
    %v87 = vld [vmem:[%s1 + $0x1f0] sm:$0xff]
    %v88 = vld [vmem:[%s1 + $0x1f8] sm:$0xff]
    %v89 = vld [vmem:[%s1 + $0x200] sm:$0xff]
    %v90 = vld [vmem:[%s1 + $0x208] sm:$0xff]
    %v91 = vld [vmem:[%s1 + $0x210] sm:$0xff]
    %v92 = vld [vmem:[%s1 + $0x218] sm:$0xff]
    %v93 = vld [vmem:[%s1 + $0x220] sm:$0xff]
    %v94 = vld [vmem:[%s1 + $0x228] sm:$0xff]
    %v95 = vld [vmem:[%s1 + $0x230] sm:$0xff]
    %v96 = vld [vmem:[%s1 + $0x238] sm:$0xff]
    %v97 = vld [vmem:[%s1 + $0x240] sm:$0xff]
    %v98 = vld [vmem:[%s1 + $0x248] sm:$0xff]
    %v99 = vld [vmem:[%s1 + $0x250] sm:$0xff]
    %v100 = vld [vmem:[%s1 + $0x258] sm:$0xff]
    %v101 = vld [vmem:[%s1 + $0x260] sm:$0xff]
    %v102 = vld [vmem:[%s1 + $0x268] sm:$0xff]
    %v103 = vld [vmem:[%s1 + $0x270] sm:$0xff]
    %v104 = vld [vmem:[%s1 + $0x278] sm:$0xff]
    %v105 = vld [vmem:[%s1 + $0x280] sm:$0xff]
    %v106 = vld [vmem:[%s1 + $0x288] sm:$0xff]
    %v107 = vld [vmem:[%s1 + $0x290] sm:$0xff]
    %v108 = vld [vmem:[%s1 + $0x298] sm:$0xff]
    %v109 = vld [vmem:[%s1 + $0x2a0] sm:$0xff]
    %v110 = vld [vmem:[%s1 + $0x2a8] sm:$0xff]
    %v111 = vld [vmem:[%s1 + $0x2b0] sm:$0xff]
    %v112 = vld [vmem:[%s1 + $0x2b8] sm:$0xff]
    %v113 = vld [vmem:[%s1 + $0x2c0] sm:$0xff]
    %v114 = vld [vmem:[%s1 + $0x2c8] sm:$0xff]
    %v115 = vld [vmem:[%s1 + $0x2d0] sm:$0xff]
    %v116 = vld [vmem:[%s1 + $0x2d8] sm:$0xff]
    %v117 = vld [vmem:[%s1 + $0x2e0] sm:$0xff]
    %v118 = vld [vmem:[%s1 + $0x2e8] sm:$0xff]
    %v119 = vld [vmem:[%s1 + $0x2f0] sm:$0xff]
    %v120 = vld [vmem:[%s1 + $0x2f8] sm:$0xff]
    %v121 = vld [vmem:[%s1 + $0x300] sm:$0xff]
    %v122 = vld [vmem:[%s1 + $0x308] sm:$0xff]
    %v123 = vld [vmem:[%s1 + $0x310] sm:$0xff]
    %v124 = vld [vmem:[%s1 + $0x318] sm:$0xff]
    %v125 = vld [vmem:[%s1 + $0x320] sm:$0xff]
    %v126 = vld [vmem:[%s1 + $0x328] sm:$0xff]
    %v127 = vld [vmem:[%s1 + $0x330] sm:$0xff]
    %v128 = vld [vmem:[%s1 + $0x338] sm:$0xff]
    %v129 = vld [vmem:[%s1 + $0x340] sm:$0xff]
    %v130 = vld [vmem:[%s1 + $0x348] sm:$0xff]
    %v131 = vld [vmem:[%s1 + $0x350] sm:$0xff]
    %v132 = vld [vmem:[%s1 + $0x358] sm:$0xff]
    %v133 = vld [vmem:[%s1 + $0x360] sm:$0xff]
    %v134 = vld [vmem:[%s1 + $0x368] sm:$0xff]
    %v135 = vld [vmem:[%s1 + $0x370] sm:$0xff]
    %v136 = vld [vmem:[%s1 + $0x378] sm:$0xff]
    %v137 = vld [vmem:[%s1 + $0x380] sm:$0xff]
    %v138 = vld [vmem:[%s1 + $0x388] sm:$0xff]
    %v139 = vld [vmem:[%s1 + $0x390] sm:$0xff]
    %v140 = vld [vmem:[%s1 + $0x398] sm:$0xff]
    %v141 = vld [vmem:[%s1 + $0x3a0] sm:$0xff]
    %v142 = vld [vmem:[%s1 + $0x3a8] sm:$0xff]
    %v143 = vld [vmem:[%s1 + $0x3b0] sm:$0xff]
    %v144 = vld [vmem:[%s1 + $0x3b8] sm:$0xff]
    %v145 = vld [vmem:[%s1 + $0x3c0] sm:$0xff]
    %v146 = vld [vmem:[%s1 + $0x3c8] sm:$0xff]
    %v147 = vld [vmem:[%s1 + $0x3d0] sm:$0xff]
    %v148 = vld [vmem:[%s1 + $0x3d8] sm:$0xff]
    %v149 = vld [vmem:[%s1 + $0x3e0] sm:$0xff]
    %v150 = vld [vmem:[%s1 + $0x3e8] sm:$0xff]
    %v151 = vld [vmem:[%s1 + $0x3f0] sm:$0xff]
    %v152 = vld [vmem:[%s1 + $0x3f8] sm:$0xff]
    %v153 = vld [vmem:[%s2] sm:$0x1]
    %v154 = vmax.f32 %v25, 0.0
    %v155 = vmax.f32 %v26, 0.0
    %v156 = vmax.f32 %v27, 0.0
    %v157 = vmax.f32 %v28, 0.0
    %v158 = vmax.f32 %v29, 0.0
    %v159 = vmax.f32 %v30, 0.0
    %v160 = vmax.f32 %v31, 0.0
    %v161 = vmax.f32 %v32, 0.0
    %v162 = vmax.f32 %v33, 0.0
    %v163 = vmax.f32 %v34, 0.0
    %v164 = vmax.f32 %v35, 0.0
    %v165 = vmax.f32 %v36, 0.0
    %v166 = vmax.f32 %v37, 0.0
    %v167 = vmax.f32 %v38, 0.0
    %v168 = vmax.f32 %v39, 0.0
    %v169 = vmax.f32 %v40, 0.0
    %v170 = vmax.f32 %v41, 0.0
    %v171 = vmax.f32 %v42, 0.0
    %v172 = vmax.f32 %v43, 0.0
    %v173 = vmax.f32 %v44, 0.0
    %v174 = vmax.f32 %v45, 0.0
    %v175 = vmax.f32 %v46, 0.0
    %v176 = vmax.f32 %v47, 0.0
    %v177 = vmax.f32 %v48, 0.0
    %v178 = vmax.f32 %v49, 0.0
    %v179 = vmax.f32 %v50, 0.0
    %v180 = vmax.f32 %v51, 0.0
    %v181 = vmax.f32 %v52, 0.0
    %v182 = vmax.f32 %v53, 0.0
    %v183 = vmax.f32 %v54, 0.0
    %v184 = vmax.f32 %v55, 0.0
    %v185 = vmax.f32 %v56, 0.0
    %v186 = vmax.f32 %v57, 0.0
    %v187 = vmax.f32 %v58, 0.0
    %v188 = vmax.f32 %v59, 0.0
    %v189 = vmax.f32 %v60, 0.0
    %v190 = vmax.f32 %v61, 0.0
    %v191 = vmax.f32 %v62, 0.0
    %v192 = vmax.f32 %v63, 0.0
    %v193 = vmax.f32 %v64, 0.0
    %v194 = vmax.f32 %v65, 0.0
    %v195 = vmax.f32 %v66, 0.0
    %v196 = vmax.f32 %v67, 0.0
    %v197 = vmax.f32 %v68, 0.0
    %v198 = vmax.f32 %v69, 0.0
    %v199 = vmax.f32 %v70, 0.0
    %v200 = vmax.f32 %v71, 0.0
    %v201 = vmax.f32 %v72, 0.0
    %v202 = vmax.f32 %v73, 0.0
    %v203 = vmax.f32 %v74, 0.0
    %v204 = vmax.f32 %v75, 0.0
    %v205 = vmax.f32 %v76, 0.0
    %v206 = vmax.f32 %v77, 0.0
    %v207 = vmax.f32 %v78, 0.0
    %v208 = vmax.f32 %v79, 0.0
    %v209 = vmax.f32 %v80, 0.0
    %v210 = vmax.f32 %v81, 0.0
    %v211 = vmax.f32 %v82, 0.0
    %v212 = vmax.f32 %v83, 0.0
    %v213 = vmax.f32 %v84, 0.0
    %v214 = vmax.f32 %v85, 0.0
    %v215 = vmax.f32 %v86, 0.0
    %v216 = vmax.f32 %v87, 0.0
    %v217 = vmax.f32 %v88, 0.0
    %v218 = vmax.f32 %v89, 0.0
    %v219 = vmax.f32 %v90, 0.0
    %v220 = vmax.f32 %v91, 0.0
    %v221 = vmax.f32 %v92, 0.0
    %v222 = vmax.f32 %v93, 0.0
    %v223 = vmax.f32 %v94, 0.0
    %v224 = vmax.f32 %v95, 0.0
    %v225 = vmax.f32 %v96, 0.0
    %v226 = vmax.f32 %v97, 0.0
    %v227 = vmax.f32 %v98, 0.0
    %v228 = vmax.f32 %v99, 0.0
    %v229 = vmax.f32 %v100, 0.0
    %v230 = vmax.f32 %v101, 0.0
    %v231 = vmax.f32 %v102, 0.0
    %v232 = vmax.f32 %v103, 0.0
    %v233 = vmax.f32 %v104, 0.0
    %v234 = vmax.f32 %v105, 0.0
    %v235 = vmax.f32 %v106, 0.0
    %v236 = vmax.f32 %v107, 0.0
    %v237 = vmax.f32 %v108, 0.0
    %v238 = vmax.f32 %v109, 0.0
    %v239 = vmax.f32 %v110, 0.0
    %v240 = vmax.f32 %v111, 0.0
    %v241 = vmax.f32 %v112, 0.0
    %v242 = vmax.f32 %v113, 0.0
    %v243 = vmax.f32 %v114, 0.0
    %v244 = vmax.f32 %v115, 0.0
    %v245 = vmax.f32 %v116, 0.0
    %v246 = vmax.f32 %v117, 0.0
    %v247 = vmax.f32 %v118, 0.0
    %v248 = vmax.f32 %v119, 0.0
    %v249 = vmax.f32 %v120, 0.0
    %v250 = vmax.f32 %v121, 0.0
    %v251 = vmax.f32 %v122, 0.0
    %v252 = vmax.f32 %v123, 0.0
    %v253 = vmax.f32 %v124, 0.0
    %v254 = vmax.f32 %v125, 0.0
    %v255 = vmax.f32 %v126, 0.0
    %v256 = vmax.f32 %v127, 0.0
    %v257 = vmax.f32 %v128, 0.0
    %v258 = vmax.f32 %v129, 0.0
    %v259 = vmax.f32 %v130, 0.0
    %v260 = vmax.f32 %v131, 0.0
    %v261 = vmax.f32 %v132, 0.0
    %v262 = vmax.f32 %v133, 0.0
    %v263 = vmax.f32 %v134, 0.0
    %v264 = vmax.f32 %v135, 0.0
    %v265 = vmax.f32 %v136, 0.0
    %v266 = vmax.f32 %v137, 0.0
    %v267 = vmax.f32 %v138, 0.0
    %v268 = vmax.f32 %v139, 0.0
    %v269 = vmax.f32 %v140, 0.0
    %v270 = vmax.f32 %v141, 0.0
    %v271 = vmax.f32 %v142, 0.0
    %v272 = vmax.f32 %v143, 0.0
    %v273 = vmax.f32 %v144, 0.0
    %v274 = vmax.f32 %v145, 0.0
    %v275 = vmax.f32 %v146, 0.0
    %v276 = vmax.f32 %v147, 0.0
    %v277 = vmax.f32 %v148, 0.0
    %v278 = vmax.f32 %v149, 0.0
    %v279 = vmax.f32 %v150, 0.0
    %v280 = vmax.f32 %v151, 0.0
    %v281 = vmax.f32 %v152, 0.0
    %v282 = vmin.f32 %v25, 0.0
    %v283 = vmin.f32 %v26, 0.0
    %v284 = vmin.f32 %v27, 0.0
    %v285 = vmin.f32 %v28, 0.0
    %v286 = vmin.f32 %v29, 0.0
    %v287 = vmin.f32 %v30, 0.0
    %v288 = vmin.f32 %v31, 0.0
    %v289 = vmin.f32 %v32, 0.0
    %v290 = vmin.f32 %v33, 0.0
    %v291 = vmin.f32 %v34, 0.0
    %v292 = vmin.f32 %v35, 0.0
    %v293 = vmin.f32 %v36, 0.0
    %v294 = vmin.f32 %v37, 0.0
    %v295 = vmin.f32 %v38, 0.0
    %v296 = vmin.f32 %v39, 0.0
    %v297 = vmin.f32 %v40, 0.0
    %v298 = vmin.f32 %v41, 0.0
    %v299 = vmin.f32 %v42, 0.0
    %v300 = vmin.f32 %v43, 0.0
    %v301 = vmin.f32 %v44, 0.0
    %v302 = vmin.f32 %v45, 0.0
    %v303 = vmin.f32 %v46, 0.0
    %v304 = vmin.f32 %v47, 0.0
    %v305 = vmin.f32 %v48, 0.0
    %v306 = vmin.f32 %v49, 0.0
    %v307 = vmin.f32 %v50, 0.0
    %v308 = vmin.f32 %v51, 0.0
    %v309 = vmin.f32 %v52, 0.0
    %v310 = vmin.f32 %v53, 0.0
    %v311 = vmin.f32 %v54, 0.0
    %v312 = vmin.f32 %v55, 0.0
    %v313 = vmin.f32 %v56, 0.0
    %v314 = vmin.f32 %v57, 0.0
    %v315 = vmin.f32 %v58, 0.0
    %v316 = vmin.f32 %v59, 0.0
    %v317 = vmin.f32 %v60, 0.0
    %v318 = vmin.f32 %v61, 0.0
    %v319 = vmin.f32 %v62, 0.0
    %v320 = vmin.f32 %v63, 0.0
    %v321 = vmin.f32 %v64, 0.0
    %v322 = vmin.f32 %v65, 0.0
    %v323 = vmin.f32 %v66, 0.0
    %v324 = vmin.f32 %v67, 0.0
    %v325 = vmin.f32 %v68, 0.0
    %v326 = vmin.f32 %v69, 0.0
    %v327 = vmin.f32 %v70, 0.0
    %v328 = vmin.f32 %v71, 0.0
    %v329 = vmin.f32 %v72, 0.0
    %v330 = vmin.f32 %v73, 0.0
    %v331 = vmin.f32 %v74, 0.0
    %v332 = vmin.f32 %v75, 0.0
    %v333 = vmin.f32 %v76, 0.0
    %v334 = vmin.f32 %v77, 0.0
    %v335 = vmin.f32 %v78, 0.0
    %v336 = vmin.f32 %v79, 0.0
    %v337 = vmin.f32 %v80, 0.0
    %v338 = vmin.f32 %v81, 0.0
    %v339 = vmin.f32 %v82, 0.0
    %v340 = vmin.f32 %v83, 0.0
    %v341 = vmin.f32 %v84, 0.0
    %v342 = vmin.f32 %v85, 0.0
    %v343 = vmin.f32 %v86, 0.0
    %v344 = vmin.f32 %v87, 0.0
    %v345 = vmin.f32 %v88, 0.0
    %v346 = vmin.f32 %v89, 0.0
    %v347 = vmin.f32 %v90, 0.0
    %v348 = vmin.f32 %v91, 0.0
    %v349 = vmin.f32 %v92, 0.0
    %v350 = vmin.f32 %v93, 0.0
    %v351 = vmin.f32 %v94, 0.0
    %v352 = vmin.f32 %v95, 0.0
    %v353 = vmin.f32 %v96, 0.0
    %v354 = vmin.f32 %v97, 0.0
    %v355 = vmin.f32 %v98, 0.0
    %v356 = vmin.f32 %v99, 0.0
    %v357 = vmin.f32 %v100, 0.0
    %v358 = vmin.f32 %v101, 0.0
    %v359 = vmin.f32 %v102, 0.0
    %v360 = vmin.f32 %v103, 0.0
    %v361 = vmin.f32 %v104, 0.0
    %v362 = vmin.f32 %v105, 0.0
    %v363 = vmin.f32 %v106, 0.0
    %v364 = vmin.f32 %v107, 0.0
    %v365 = vmin.f32 %v108, 0.0
    %v366 = vmin.f32 %v109, 0.0
    %v367 = vmin.f32 %v110, 0.0
    %v368 = vmin.f32 %v111, 0.0
    %v369 = vmin.f32 %v112, 0.0
    %v370 = vmin.f32 %v113, 0.0
    %v371 = vmin.f32 %v114, 0.0
    %v372 = vmin.f32 %v115, 0.0
    %v373 = vmin.f32 %v116, 0.0
    %v374 = vmin.f32 %v117, 0.0
    %v375 = vmin.f32 %v118, 0.0
    %v376 = vmin.f32 %v119, 0.0
    %v377 = vmin.f32 %v120, 0.0
    %v378 = vmin.f32 %v121, 0.0
    %v379 = vmin.f32 %v122, 0.0
    %v380 = vmin.f32 %v123, 0.0
    %v381 = vmin.f32 %v124, 0.0
    %v382 = vmin.f32 %v125, 0.0
    %v383 = vmin.f32 %v126, 0.0
    %v384 = vmin.f32 %v127, 0.0
    %v385 = vmin.f32 %v128, 0.0
    %v386 = vmin.f32 %v129, 0.0
    %v387 = vmin.f32 %v130, 0.0
    %v388 = vmin.f32 %v131, 0.0
    %v389 = vmin.f32 %v132, 0.0
    %v390 = vmin.f32 %v133, 0.0
    %v391 = vmin.f32 %v134, 0.0
    %v392 = vmin.f32 %v135, 0.0
    %v393 = vmin.f32 %v136, 0.0
    %v394 = vmin.f32 %v137, 0.0
    %v395 = vmin.f32 %v138, 0.0
    %v396 = vmin.f32 %v139, 0.0
    %v397 = vmin.f32 %v140, 0.0
    %v398 = vmin.f32 %v141, 0.0
    %v399 = vmin.f32 %v142, 0.0
    %v400 = vmin.f32 %v143, 0.0
    %v401 = vmin.f32 %v144, 0.0
    %v402 = vmin.f32 %v145, 0.0
    %v403 = vmin.f32 %v146, 0.0
    %v404 = vmin.f32 %v147, 0.0
    %v405 = vmin.f32 %v148, 0.0
    %v406 = vmin.f32 %v149, 0.0
    %v407 = vmin.f32 %v150, 0.0
    %v408 = vmin.f32 %v151, 0.0
    %v409 = vmin.f32 %v152, 0.0
    %v414 = vcombine.high %v21, %v21
    %v415 = vcombine.high %v22, %v22
    %v416 = vcombine.high %v23, %v23
    %v417 = vcombine.high %v24, %v24
    %422 = vmatprep.subr.mxu0 0.0
    %423 = vmatpush1.msra.mxu0 %v169
    %424 = vmatprep.subr.mxu0 0.0
    %425 = vmatpush1.msra.mxu0 %v168
    %426 = vmatprep.subr.mxu0 0.0
    %427 = vmatpush1.msra.mxu0 %v167
    %428 = vmatprep.subr.mxu0 0.0
    %429 = vmatpush1.msra.mxu0 %v166
    %430 = vmatprep.subr.mxu0 0.0
    %431 = vmatpush1.msra.mxu0 %v165
    %432 = vmatprep.subr.mxu0 0.0
    %433 = vmatpush1.msra.mxu0 %v164
    %434 = vmatprep.subr.mxu0 0.0
    %435 = vmatpush1.msra.mxu0 %v163
    %436 = vmatprep.subr.mxu0 0.0
    %437 = vmatpush1.msra.mxu0 %v162
    %438 = vmatprep.subr.mxu0 0.0
    %439 = vmatpush1.msra.mxu0 %v161
    %440 = vmatprep.subr.mxu0 0.0
    %441 = vmatpush1.msra.mxu0 %v160
    %442 = vmatprep.subr.mxu0 0.0
    %443 = vmatpush1.msra.mxu0 %v159
    %444 = vmatprep.subr.mxu0 0.0
    %445 = vmatpush1.msra.mxu0 %v158
    %446 = vmatprep.subr.mxu0 0.0
    %447 = vmatpush1.msra.mxu0 %v157
    %448 = vmatprep.subr.mxu0 0.0
    %449 = vmatpush1.msra.mxu0 %v156
    %450 = vmatprep.subr.mxu0 0.0
    %451 = vmatpush1.msra.mxu0 %v155
    %452 = vmatprep.subr.mxu0 0.0
    %453 = vmatpush1.msra.mxu0 %v154
    %454 = vmatprep.subr.mxu0 0.0
    %455 = vmatpush2.msra.mxu0 %v185
    %456 = vmatprep.subr.mxu0 0.0
    %457 = vmatpush2.msra.mxu0 %v184
    %458 = vmatprep.subr.mxu0 0.0
    %459 = vmatpush2.msra.mxu0 %v183
    %460 = vmatprep.subr.mxu0 0.0
    %461 = vmatpush2.msra.mxu0 %v182
    %462 = vmatprep.subr.mxu0 0.0
    %463 = vmatpush2.msra.mxu0 %v181
    %464 = vmatprep.subr.mxu0 0.0
    %465 = vmatpush2.msra.mxu0 %v180
    %466 = vmatprep.subr.mxu0 0.0
    %467 = vmatpush2.msra.mxu0 %v179
    %468 = vmatprep.subr.mxu0 0.0
    %469 = vmatpush2.msra.mxu0 %v178
    %470 = vmatprep.subr.mxu0 0.0
    %471 = vmatpush2.msra.mxu0 %v177
    %472 = vmatprep.subr.mxu0 0.0
    %473 = vmatpush2.msra.mxu0 %v176
    %474 = vmatprep.subr.mxu0 0.0
    %475 = vmatpush2.msra.mxu0 %v175
    %476 = vmatprep.subr.mxu0 0.0
    %477 = vmatpush2.msra.mxu0 %v174
    %478 = vmatprep.subr.mxu0 0.0
    %479 = vmatpush2.msra.mxu0 %v173
    %480 = vmatprep.subr.mxu0 0.0
    %481 = vmatpush2.msra.mxu0 %v172
    %482 = vmatprep.subr.mxu0 0.0
    %483 = vmatpush2.msra.mxu0 %v171
    %484 = vmatprep.subr.mxu0 0.0
    %485 = vmatpush2.msra.mxu0 %v170
    %486 = vmatprep.mubr.f32.mxu0 %v414
    %487 = vmatmul.mubr.f32.gmra.mxu0 %v21
    %v488 = vpop.f32.mrf.mxu0
    %v489 = vadd.f32 0.0, %v488
    %v490 = vpop.f32.mrf.mxu0
    %491 = vdwg.mxu0
    %492 = vmatprep.subr.mxu0 0.0
    %493 = vmatpush1.msra.mxu0 %v201
    %494 = vmatprep.subr.mxu0 0.0
    %495 = vmatpush1.msra.mxu0 %v200
    %496 = vmatprep.subr.mxu0 0.0
    %497 = vmatpush1.msra.mxu0 %v199
    %498 = vmatprep.subr.mxu0 0.0
    %499 = vmatpush1.msra.mxu0 %v198
    %500 = vmatprep.subr.mxu0 0.0
    %501 = vmatpush1.msra.mxu0 %v197
    %502 = vmatprep.subr.mxu0 0.0
    %503 = vmatpush1.msra.mxu0 %v196
    %504 = vmatprep.subr.mxu0 0.0
    %505 = vmatpush1.msra.mxu0 %v195
    %506 = vmatprep.subr.mxu0 0.0
    %507 = vmatpush1.msra.mxu0 %v194
    %508 = vmatprep.subr.mxu0 0.0
    %509 = vmatpush1.msra.mxu0 %v193
    %510 = vmatprep.subr.mxu0 0.0
    %511 = vmatpush1.msra.mxu0 %v192
    %512 = vmatprep.subr.mxu0 0.0
    %513 = vmatpush1.msra.mxu0 %v191
    %514 = vmatprep.subr.mxu0 0.0
    %515 = vmatpush1.msra.mxu0 %v190
    %516 = vmatprep.subr.mxu0 0.0
    %517 = vmatpush1.msra.mxu0 %v189
    %518 = vmatprep.subr.mxu0 0.0
    %519 = vmatpush1.msra.mxu0 %v188
    %520 = vmatprep.subr.mxu0 0.0
    %521 = vmatpush1.msra.mxu0 %v187
    %522 = vmatprep.subr.mxu0 0.0
    %523 = vmatpush1.msra.mxu0 %v186
    %524 = vmatprep.subr.mxu0 0.0
    %525 = vmatpush2.msra.mxu0 %v217
    %526 = vmatprep.subr.mxu0 0.0
    %527 = vmatpush2.msra.mxu0 %v216
    %528 = vmatprep.subr.mxu0 0.0
    %529 = vmatpush2.msra.mxu0 %v215
    %530 = vmatprep.subr.mxu0 0.0
    %531 = vmatpush2.msra.mxu0 %v214
    %532 = vmatprep.subr.mxu0 0.0
    %533 = vmatpush2.msra.mxu0 %v213
    %534 = vmatprep.subr.mxu0 0.0
    %535 = vmatpush2.msra.mxu0 %v212
    %536 = vmatprep.subr.mxu0 0.0
    %537 = vmatpush2.msra.mxu0 %v211
    %538 = vmatprep.subr.mxu0 0.0
    %539 = vmatpush2.msra.mxu0 %v210
    %540 = vmatprep.subr.mxu0 0.0
    %541 = vmatpush2.msra.mxu0 %v209
    %542 = vmatprep.subr.mxu0 0.0
    %543 = vmatpush2.msra.mxu0 %v208
    %544 = vmatprep.subr.mxu0 0.0
    %545 = vmatpush2.msra.mxu0 %v207
    %546 = vmatprep.subr.mxu0 0.0
    %547 = vmatpush2.msra.mxu0 %v206
    %548 = vmatprep.subr.mxu0 0.0
    %549 = vmatpush2.msra.mxu0 %v205
    %550 = vmatprep.subr.mxu0 0.0
    %551 = vmatpush2.msra.mxu0 %v204
    %552 = vmatprep.subr.mxu0 0.0
    %553 = vmatpush2.msra.mxu0 %v203
    %554 = vmatprep.subr.mxu0 0.0
    %555 = vmatpush2.msra.mxu0 %v202
    %556 = vmatprep.mubr.f32.mxu0 %v415
    %557 = vmatmul.mubr.f32.gmra.mxu0 %v22
    %v558 = vpop.f32.mrf.mxu0
    %v559 = vadd.f32 %v489, %v558
    %v560 = vpop.f32.mrf.mxu0
    %561 = vdwg.mxu0
    %562 = vmatprep.subr.mxu0 0.0
    %563 = vmatpush1.msra.mxu0 %v233
    %564 = vmatprep.subr.mxu0 0.0
    %565 = vmatpush1.msra.mxu0 %v232
    %566 = vmatprep.subr.mxu0 0.0
    %567 = vmatpush1.msra.mxu0 %v231
    %568 = vmatprep.subr.mxu0 0.0
    %569 = vmatpush1.msra.mxu0 %v230
    %570 = vmatprep.subr.mxu0 0.0
    %571 = vmatpush1.msra.mxu0 %v229
    %572 = vmatprep.subr.mxu0 0.0
    %573 = vmatpush1.msra.mxu0 %v228
    %574 = vmatprep.subr.mxu0 0.0
    %575 = vmatpush1.msra.mxu0 %v227
    %576 = vmatprep.subr.mxu0 0.0
    %577 = vmatpush1.msra.mxu0 %v226
    %578 = vmatprep.subr.mxu0 0.0
    %579 = vmatpush1.msra.mxu0 %v225
    %580 = vmatprep.subr.mxu0 0.0
    %581 = vmatpush1.msra.mxu0 %v224
    %582 = vmatprep.subr.mxu0 0.0
    %583 = vmatpush1.msra.mxu0 %v223
    %584 = vmatprep.subr.mxu0 0.0
    %585 = vmatpush1.msra.mxu0 %v222
    %586 = vmatprep.subr.mxu0 0.0
    %587 = vmatpush1.msra.mxu0 %v221
    %588 = vmatprep.subr.mxu0 0.0
    %589 = vmatpush1.msra.mxu0 %v220
    %590 = vmatprep.subr.mxu0 0.0
    %591 = vmatpush1.msra.mxu0 %v219
    %592 = vmatprep.subr.mxu0 0.0
    %593 = vmatpush1.msra.mxu0 %v218
    %594 = vmatprep.subr.mxu0 0.0
    %595 = vmatpush2.msra.mxu0 %v249
    %596 = vmatprep.subr.mxu0 0.0
    %597 = vmatpush2.msra.mxu0 %v248
    %598 = vmatprep.subr.mxu0 0.0
    %599 = vmatpush2.msra.mxu0 %v247
    %600 = vmatprep.subr.mxu0 0.0
    %601 = vmatpush2.msra.mxu0 %v246
    %602 = vmatprep.subr.mxu0 0.0
    %603 = vmatpush2.msra.mxu0 %v245
    %604 = vmatprep.subr.mxu0 0.0
    %605 = vmatpush2.msra.mxu0 %v244
    %606 = vmatprep.subr.mxu0 0.0
    %607 = vmatpush2.msra.mxu0 %v243
    %608 = vmatprep.subr.mxu0 0.0
    %609 = vmatpush2.msra.mxu0 %v242
    %610 = vmatprep.subr.mxu0 0.0
    %611 = vmatpush2.msra.mxu0 %v241
    %612 = vmatprep.subr.mxu0 0.0
    %613 = vmatpush2.msra.mxu0 %v240
    %614 = vmatprep.subr.mxu0 0.0
    %615 = vmatpush2.msra.mxu0 %v239
    %616 = vmatprep.subr.mxu0 0.0
    %617 = vmatpush2.msra.mxu0 %v238
    %618 = vmatprep.subr.mxu0 0.0
    %619 = vmatpush2.msra.mxu0 %v237
    %620 = vmatprep.subr.mxu0 0.0
    %621 = vmatpush2.msra.mxu0 %v236
    %622 = vmatprep.subr.mxu0 0.0
    %623 = vmatpush2.msra.mxu0 %v235
    %624 = vmatprep.subr.mxu0 0.0
    %625 = vmatpush2.msra.mxu0 %v234
    %626 = vmatprep.mubr.f32.mxu0 %v416
    %627 = vmatmul.mubr.f32.gmra.mxu0 %v23
    %v628 = vpop.f32.mrf.mxu0
    %v629 = vadd.f32 %v559, %v628
    %v630 = vpop.f32.mrf.mxu0
    %631 = vdwg.mxu0
    %632 = vmatprep.subr.mxu0 0.0
    %633 = vmatpush1.msra.mxu0 %v265
    %634 = vmatprep.subr.mxu0 0.0
    %635 = vmatpush1.msra.mxu0 %v264
    %636 = vmatprep.subr.mxu0 0.0
    %637 = vmatpush1.msra.mxu0 %v263
    %638 = vmatprep.subr.mxu0 0.0
    %639 = vmatpush1.msra.mxu0 %v262
    %640 = vmatprep.subr.mxu0 0.0
    %641 = vmatpush1.msra.mxu0 %v261
    %642 = vmatprep.subr.mxu0 0.0
    %643 = vmatpush1.msra.mxu0 %v260
    %644 = vmatprep.subr.mxu0 0.0
    %645 = vmatpush1.msra.mxu0 %v259
    %646 = vmatprep.subr.mxu0 0.0
    %647 = vmatpush1.msra.mxu0 %v258
    %648 = vmatprep.subr.mxu0 0.0
    %649 = vmatpush1.msra.mxu0 %v257
    %650 = vmatprep.subr.mxu0 0.0
    %651 = vmatpush1.msra.mxu0 %v256
    %652 = vmatprep.subr.mxu0 0.0
    %653 = vmatpush1.msra.mxu0 %v255
    %654 = vmatprep.subr.mxu0 0.0
    %655 = vmatpush1.msra.mxu0 %v254
    %656 = vmatprep.subr.mxu0 0.0
    %657 = vmatpush1.msra.mxu0 %v253
    %658 = vmatprep.subr.mxu0 0.0
    %659 = vmatpush1.msra.mxu0 %v252
    %660 = vmatprep.subr.mxu0 0.0
    %661 = vmatpush1.msra.mxu0 %v251
    %662 = vmatprep.subr.mxu0 0.0
    %663 = vmatpush1.msra.mxu0 %v250
    %664 = vmatprep.subr.mxu0 0.0
    %665 = vmatpush2.msra.mxu0 %v281
    %666 = vmatprep.subr.mxu0 0.0
    %667 = vmatpush2.msra.mxu0 %v280
    %668 = vmatprep.subr.mxu0 0.0
    %669 = vmatpush2.msra.mxu0 %v279
    %670 = vmatprep.subr.mxu0 0.0
    %671 = vmatpush2.msra.mxu0 %v278
    %672 = vmatprep.subr.mxu0 0.0
    %673 = vmatpush2.msra.mxu0 %v277
    %674 = vmatprep.subr.mxu0 0.0
    %675 = vmatpush2.msra.mxu0 %v276
    %676 = vmatprep.subr.mxu0 0.0
    %677 = vmatpush2.msra.mxu0 %v275
    %678 = vmatprep.subr.mxu0 0.0
    %679 = vmatpush2.msra.mxu0 %v274
    %680 = vmatprep.subr.mxu0 0.0
    %681 = vmatpush2.msra.mxu0 %v273
    %682 = vmatprep.subr.mxu0 0.0
    %683 = vmatpush2.msra.mxu0 %v272
    %684 = vmatprep.subr.mxu0 0.0
    %685 = vmatpush2.msra.mxu0 %v271
    %686 = vmatprep.subr.mxu0 0.0
    %687 = vmatpush2.msra.mxu0 %v270
    %688 = vmatprep.subr.mxu0 0.0
    %689 = vmatpush2.msra.mxu0 %v269
    %690 = vmatprep.subr.mxu0 0.0
    %691 = vmatpush2.msra.mxu0 %v268
    %692 = vmatprep.subr.mxu0 0.0
    %693 = vmatpush2.msra.mxu0 %v267
    %694 = vmatprep.subr.mxu0 0.0
    %695 = vmatpush2.msra.mxu0 %v266
    %696 = vmatprep.mubr.f32.mxu0 %v417
    %697 = vmatmul.mubr.f32.gmra.mxu0 %v24
    %v698 = vpop.f32.mrf.mxu0
    %v699 = vadd.f32 %v629, %v698
    %v700 = vpop.f32.mrf.mxu0
    %701 = vdwg.mxu0
    %702 = vmatprep.subr.mxu0 0.0
    %703 = vmatpush1.msra.mxu0 %v297
    %704 = vmatprep.subr.mxu0 0.0
    %705 = vmatpush1.msra.mxu0 %v296
    %706 = vmatprep.subr.mxu0 0.0
    %707 = vmatpush1.msra.mxu0 %v295
    %708 = vmatprep.subr.mxu0 0.0
    %709 = vmatpush1.msra.mxu0 %v294
    %710 = vmatprep.subr.mxu0 0.0
    %711 = vmatpush1.msra.mxu0 %v293
    %712 = vmatprep.subr.mxu0 0.0
    %713 = vmatpush1.msra.mxu0 %v292
    %714 = vmatprep.subr.mxu0 0.0
    %715 = vmatpush1.msra.mxu0 %v291
    %716 = vmatprep.subr.mxu0 0.0
    %717 = vmatpush1.msra.mxu0 %v290
    %718 = vmatprep.subr.mxu0 0.0
    %719 = vmatpush1.msra.mxu0 %v289
    %720 = vmatprep.subr.mxu0 0.0
    %721 = vmatpush1.msra.mxu0 %v288
    %722 = vmatprep.subr.mxu0 0.0
    %723 = vmatpush1.msra.mxu0 %v287
    %724 = vmatprep.subr.mxu0 0.0
    %725 = vmatpush1.msra.mxu0 %v286
    %726 = vmatprep.subr.mxu0 0.0
    %727 = vmatpush1.msra.mxu0 %v285
    %728 = vmatprep.subr.mxu0 0.0
    %729 = vmatpush1.msra.mxu0 %v284
    %730 = vmatprep.subr.mxu0 0.0
    %731 = vmatpush1.msra.mxu0 %v283
    %732 = vmatprep.subr.mxu0 0.0
    %733 = vmatpush1.msra.mxu0 %v282
    %734 = vmatprep.subr.mxu0 0.0
    %735 = vmatpush2.msra.mxu0 %v313
    %736 = vmatprep.subr.mxu0 0.0
    %737 = vmatpush2.msra.mxu0 %v312
    %738 = vmatprep.subr.mxu0 0.0
    %739 = vmatpush2.msra.mxu0 %v311
    %740 = vmatprep.subr.mxu0 0.0
    %741 = vmatpush2.msra.mxu0 %v310
    %742 = vmatprep.subr.mxu0 0.0
    %743 = vmatpush2.msra.mxu0 %v309
    %744 = vmatprep.subr.mxu0 0.0
    %745 = vmatpush2.msra.mxu0 %v308
    %746 = vmatprep.subr.mxu0 0.0
    %747 = vmatpush2.msra.mxu0 %v307
    %748 = vmatprep.subr.mxu0 0.0
    %749 = vmatpush2.msra.mxu0 %v306
    %750 = vmatprep.subr.mxu0 0.0
    %751 = vmatpush2.msra.mxu0 %v305
    %752 = vmatprep.subr.mxu0 0.0
    %753 = vmatpush2.msra.mxu0 %v304
    %754 = vmatprep.subr.mxu0 0.0
    %755 = vmatpush2.msra.mxu0 %v303
    %756 = vmatprep.subr.mxu0 0.0
    %757 = vmatpush2.msra.mxu0 %v302
    %758 = vmatprep.subr.mxu0 0.0
    %759 = vmatpush2.msra.mxu0 %v301
    %760 = vmatprep.subr.mxu0 0.0
    %761 = vmatpush2.msra.mxu0 %v300
    %762 = vmatprep.subr.mxu0 0.0
    %763 = vmatpush2.msra.mxu0 %v299
    %764 = vmatprep.subr.mxu0 0.0
    %765 = vmatpush2.msra.mxu0 %v298
    %766 = vmatprep.mubr.f32.mxu0 %v414
    %767 = vmatmul.mubr.f32.gmra.mxu0 %v21
    %v768 = vpop.f32.mrf.mxu0
    %v769 = vadd.f32 0.0, %v768
    %v770 = vpop.f32.mrf.mxu0
    %771 = vdwg.mxu0
    %772 = vmatprep.subr.mxu0 0.0
    %773 = vmatpush1.msra.mxu0 %v329
    %774 = vmatprep.subr.mxu0 0.0
    %775 = vmatpush1.msra.mxu0 %v328
    %776 = vmatprep.subr.mxu0 0.0
    %777 = vmatpush1.msra.mxu0 %v327
    %778 = vmatprep.subr.mxu0 0.0
    %779 = vmatpush1.msra.mxu0 %v326
    %780 = vmatprep.subr.mxu0 0.0
    %781 = vmatpush1.msra.mxu0 %v325
    %782 = vmatprep.subr.mxu0 0.0
    %783 = vmatpush1.msra.mxu0 %v324
    %784 = vmatprep.subr.mxu0 0.0
    %785 = vmatpush1.msra.mxu0 %v323
    %786 = vmatprep.subr.mxu0 0.0
    %787 = vmatpush1.msra.mxu0 %v322
    %788 = vmatprep.subr.mxu0 0.0
    %789 = vmatpush1.msra.mxu0 %v321
    %790 = vmatprep.subr.mxu0 0.0
    %791 = vmatpush1.msra.mxu0 %v320
    %792 = vmatprep.subr.mxu0 0.0
    %793 = vmatpush1.msra.mxu0 %v319
    %794 = vmatprep.subr.mxu0 0.0
    %795 = vmatpush1.msra.mxu0 %v318
    %796 = vmatprep.subr.mxu0 0.0
    %797 = vmatpush1.msra.mxu0 %v317
    %798 = vmatprep.subr.mxu0 0.0
    %799 = vmatpush1.msra.mxu0 %v316
    %800 = vmatprep.subr.mxu0 0.0
    %801 = vmatpush1.msra.mxu0 %v315
    %802 = vmatprep.subr.mxu0 0.0
    %803 = vmatpush1.msra.mxu0 %v314
    %804 = vmatprep.subr.mxu0 0.0
    %805 = vmatpush2.msra.mxu0 %v345
    %806 = vmatprep.subr.mxu0 0.0
    %807 = vmatpush2.msra.mxu0 %v344
    %808 = vmatprep.subr.mxu0 0.0
    %809 = vmatpush2.msra.mxu0 %v343
    %810 = vmatprep.subr.mxu0 0.0
    %811 = vmatpush2.msra.mxu0 %v342
    %812 = vmatprep.subr.mxu0 0.0
    %813 = vmatpush2.msra.mxu0 %v341
    %814 = vmatprep.subr.mxu0 0.0
    %815 = vmatpush2.msra.mxu0 %v340
    %816 = vmatprep.subr.mxu0 0.0
    %817 = vmatpush2.msra.mxu0 %v339
    %818 = vmatprep.subr.mxu0 0.0
    %819 = vmatpush2.msra.mxu0 %v338
    %820 = vmatprep.subr.mxu0 0.0
    %821 = vmatpush2.msra.mxu0 %v337
    %822 = vmatprep.subr.mxu0 0.0
    %823 = vmatpush2.msra.mxu0 %v336
    %824 = vmatprep.subr.mxu0 0.0
    %825 = vmatpush2.msra.mxu0 %v335
    %826 = vmatprep.subr.mxu0 0.0
    %827 = vmatpush2.msra.mxu0 %v334
    %828 = vmatprep.subr.mxu0 0.0
    %829 = vmatpush2.msra.mxu0 %v333
    %830 = vmatprep.subr.mxu0 0.0
    %831 = vmatpush2.msra.mxu0 %v332
    %832 = vmatprep.subr.mxu0 0.0
    %833 = vmatpush2.msra.mxu0 %v331
    %834 = vmatprep.subr.mxu0 0.0
    %835 = vmatpush2.msra.mxu0 %v330
    %836 = vmatprep.mubr.f32.mxu0 %v415
    %837 = vmatmul.mubr.f32.gmra.mxu0 %v22
    %v838 = vpop.f32.mrf.mxu0
    %v839 = vadd.f32 %v769, %v838
    %v840 = vpop.f32.mrf.mxu0
    %841 = vdwg.mxu0
    %842 = vmatprep.subr.mxu0 0.0
    %843 = vmatpush1.msra.mxu0 %v361
    %844 = vmatprep.subr.mxu0 0.0
    %845 = vmatpush1.msra.mxu0 %v360
    %846 = vmatprep.subr.mxu0 0.0
    %847 = vmatpush1.msra.mxu0 %v359
    %848 = vmatprep.subr.mxu0 0.0
    %849 = vmatpush1.msra.mxu0 %v358
    %850 = vmatprep.subr.mxu0 0.0
    %851 = vmatpush1.msra.mxu0 %v357
    %852 = vmatprep.subr.mxu0 0.0
    %853 = vmatpush1.msra.mxu0 %v356
    %854 = vmatprep.subr.mxu0 0.0
    %855 = vmatpush1.msra.mxu0 %v355
    %856 = vmatprep.subr.mxu0 0.0
    %857 = vmatpush1.msra.mxu0 %v354
    %858 = vmatprep.subr.mxu0 0.0
    %859 = vmatpush1.msra.mxu0 %v353
    %860 = vmatprep.subr.mxu0 0.0
    %861 = vmatpush1.msra.mxu0 %v352
    %862 = vmatprep.subr.mxu0 0.0
    %863 = vmatpush1.msra.mxu0 %v351
    %864 = vmatprep.subr.mxu0 0.0
    %865 = vmatpush1.msra.mxu0 %v350
    %866 = vmatprep.subr.mxu0 0.0
    %867 = vmatpush1.msra.mxu0 %v349
    %868 = vmatprep.subr.mxu0 0.0
    %869 = vmatpush1.msra.mxu0 %v348
    %870 = vmatprep.subr.mxu0 0.0
    %871 = vmatpush1.msra.mxu0 %v347
    %872 = vmatprep.subr.mxu0 0.0
    %873 = vmatpush1.msra.mxu0 %v346
    %874 = vmatprep.subr.mxu0 0.0
    %875 = vmatpush2.msra.mxu0 %v377
    %876 = vmatprep.subr.mxu0 0.0
    %877 = vmatpush2.msra.mxu0 %v376
    %878 = vmatprep.subr.mxu0 0.0
    %879 = vmatpush2.msra.mxu0 %v375
    %880 = vmatprep.subr.mxu0 0.0
    %881 = vmatpush2.msra.mxu0 %v374
    %882 = vmatprep.subr.mxu0 0.0
    %883 = vmatpush2.msra.mxu0 %v373
    %884 = vmatprep.subr.mxu0 0.0
    %885 = vmatpush2.msra.mxu0 %v372
    %886 = vmatprep.subr.mxu0 0.0
    %887 = vmatpush2.msra.mxu0 %v371
    %888 = vmatprep.subr.mxu0 0.0
    %889 = vmatpush2.msra.mxu0 %v370
    %890 = vmatprep.subr.mxu0 0.0
    %891 = vmatpush2.msra.mxu0 %v369
    %892 = vmatprep.subr.mxu0 0.0
    %893 = vmatpush2.msra.mxu0 %v368
    %894 = vmatprep.subr.mxu0 0.0
    %895 = vmatpush2.msra.mxu0 %v367
    %896 = vmatprep.subr.mxu0 0.0
    %897 = vmatpush2.msra.mxu0 %v366
    %898 = vmatprep.subr.mxu0 0.0
    %899 = vmatpush2.msra.mxu0 %v365
    %900 = vmatprep.subr.mxu0 0.0
    %901 = vmatpush2.msra.mxu0 %v364
    %902 = vmatprep.subr.mxu0 0.0
    %903 = vmatpush2.msra.mxu0 %v363
    %904 = vmatprep.subr.mxu0 0.0
    %905 = vmatpush2.msra.mxu0 %v362
    %906 = vmatprep.mubr.f32.mxu0 %v416
    %907 = vmatmul.mubr.f32.gmra.mxu0 %v23
    %v908 = vpop.f32.mrf.mxu0
    %v909 = vadd.f32 %v839, %v908
    %v910 = vpop.f32.mrf.mxu0
    %911 = vdwg.mxu0
    %912 = vmatprep.subr.mxu0 0.0
    %913 = vmatpush1.msra.mxu0 %v393
    %914 = vmatprep.subr.mxu0 0.0
    %915 = vmatpush1.msra.mxu0 %v392
    %916 = vmatprep.subr.mxu0 0.0
    %917 = vmatpush1.msra.mxu0 %v391
    %918 = vmatprep.subr.mxu0 0.0
    %919 = vmatpush1.msra.mxu0 %v390
    %920 = vmatprep.subr.mxu0 0.0
    %921 = vmatpush1.msra.mxu0 %v389
    %922 = vmatprep.subr.mxu0 0.0
    %923 = vmatpush1.msra.mxu0 %v388
    %924 = vmatprep.subr.mxu0 0.0
    %925 = vmatpush1.msra.mxu0 %v387
    %926 = vmatprep.subr.mxu0 0.0
    %927 = vmatpush1.msra.mxu0 %v386
    %928 = vmatprep.subr.mxu0 0.0
    %929 = vmatpush1.msra.mxu0 %v385
    %930 = vmatprep.subr.mxu0 0.0
    %931 = vmatpush1.msra.mxu0 %v384
    %932 = vmatprep.subr.mxu0 0.0
    %933 = vmatpush1.msra.mxu0 %v383
    %934 = vmatprep.subr.mxu0 0.0
    %935 = vmatpush1.msra.mxu0 %v382
    %936 = vmatprep.subr.mxu0 0.0
    %937 = vmatpush1.msra.mxu0 %v381
    %938 = vmatprep.subr.mxu0 0.0
    %939 = vmatpush1.msra.mxu0 %v380
    %940 = vmatprep.subr.mxu0 0.0
    %941 = vmatpush1.msra.mxu0 %v379
    %942 = vmatprep.subr.mxu0 0.0
    %943 = vmatpush1.msra.mxu0 %v378
    %944 = vmatprep.subr.mxu0 0.0
    %945 = vmatpush2.msra.mxu0 %v409
    %946 = vmatprep.subr.mxu0 0.0
    %947 = vmatpush2.msra.mxu0 %v408
    %948 = vmatprep.subr.mxu0 0.0
    %949 = vmatpush2.msra.mxu0 %v407
    %950 = vmatprep.subr.mxu0 0.0
    %951 = vmatpush2.msra.mxu0 %v406
    %952 = vmatprep.subr.mxu0 0.0
    %953 = vmatpush2.msra.mxu0 %v405
    %954 = vmatprep.subr.mxu0 0.0
    %955 = vmatpush2.msra.mxu0 %v404
    %956 = vmatprep.subr.mxu0 0.0
    %957 = vmatpush2.msra.mxu0 %v403
    %958 = vmatprep.subr.mxu0 0.0
    %959 = vmatpush2.msra.mxu0 %v402
    %960 = vmatprep.subr.mxu0 0.0
    %961 = vmatpush2.msra.mxu0 %v401
    %962 = vmatprep.subr.mxu0 0.0
    %963 = vmatpush2.msra.mxu0 %v400
    %964 = vmatprep.subr.mxu0 0.0
    %965 = vmatpush2.msra.mxu0 %v399
    %966 = vmatprep.subr.mxu0 0.0
    %967 = vmatpush2.msra.mxu0 %v398
    %968 = vmatprep.subr.mxu0 0.0
    %969 = vmatpush2.msra.mxu0 %v397
    %970 = vmatprep.subr.mxu0 0.0
    %971 = vmatpush2.msra.mxu0 %v396
    %972 = vmatprep.subr.mxu0 0.0
    %973 = vmatpush2.msra.mxu0 %v395
    %974 = vmatprep.subr.mxu0 0.0
    %975 = vmatpush2.msra.mxu0 %v394
    %976 = vmatprep.mubr.f32.mxu0 %v417
    %977 = vmatmul.mubr.f32.gmra.mxu0 %v24
    %v978 = vpop.f32.mrf.mxu0
    %v979 = vadd.f32 %v909, %v978
    %v980 = vpop.f32.mrf.mxu0
    %981 = vdwg.mxu0
    %v983 = vrot.slane %v979, 2
    %v985 = vadd.f32 %v699, %v983
    %v987 = vlaneseq
    %v988 = vshrl.u32 %v987, 7
    %v989 = vsub.s32 0, %v988
    %v990 = vrot.slane %v153, %v989
    %v992 = vadd.f32 %v985, %v990
    %v993 = vrot.slane %v979, 6
    %v995 = vadd.f32 %v699, %v993
    %v996 = vadd.f32 %v995, %v990
    %v997 = vmax.f32 %v992, 0.0
    %v998 = vmax.f32 %v996, 0.0
    %vm999 = vcmask 1041408
    %v1000 = vsel %vm999, %v997, %v998
    %v1001 = vld [vmem:[%s3] sm:$0xff]
    %v1002 = vld [vmem:[%s3 + $0x8] sm:$0xff]
    %v1003 = vld [vmem:[%s3 + $0x10] sm:$0xff]
    %v1004 = vld [vmem:[%s3 + $0x18] sm:$0xff]
    %v1005 = vld [vmem:[%s4] sm:$0x1]
    %v1006 = vmax.f32 %v1001, 0.0
    %v1007 = vmax.f32 %v1002, 0.0
    %v1008 = vmax.f32 %v1003, 0.0
    %v1009 = vmax.f32 %v1004, 0.0
    %v1010 = vmin.f32 %v1001, 0.0
    %v1011 = vmin.f32 %v1002, 0.0
    %v1012 = vmin.f32 %v1003, 0.0
    %v1013 = vmin.f32 %v1004, 0.0
    %vm1014 = vcmask 261120
    %v1016 = vsel %vm1014, %v1000, 0
    %1018 = vmatprep.subr.mxu0 0.0
    %1019 = vmatpush1.msra.mxu0 0.0
    %1020 = vmatprep.subr.mxu0 0.0
    %1021 = vmatpush1.msra.mxu0 0.0
    %1022 = vmatprep.subr.mxu0 0.0
    %1023 = vmatpush1.msra.mxu0 0.0
    %1024 = vmatprep.subr.mxu0 0.0
    %1025 = vmatpush1.msra.mxu0 0.0
    %1026 = vmatprep.subr.mxu0 0.0
    %1027 = vmatpush1.msra.mxu0 0.0
    %1028 = vmatprep.subr.mxu0 0.0
    %1029 = vmatpush1.msra.mxu0 0.0
    %1030 = vmatprep.subr.mxu0 0.0
    %1031 = vmatpush1.msra.mxu0 0.0
    %1032 = vmatprep.subr.mxu0 0.0
    %1033 = vmatpush1.msra.mxu0 0.0
    %1034 = vmatprep.subr.mxu0 0.0
    %1035 = vmatpush1.msra.mxu0 0.0
    %1036 = vmatprep.subr.mxu0 0.0
    %1037 = vmatpush1.msra.mxu0 0.0
    %1038 = vmatprep.subr.mxu0 0.0
    %1039 = vmatpush1.msra.mxu0 0.0
    %1040 = vmatprep.subr.mxu0 0.0
    %1041 = vmatpush1.msra.mxu0 0.0
    %1042 = vmatprep.subr.mxu0 0.0
    %1043 = vmatpush1.msra.mxu0 %v1009
    %1044 = vmatprep.subr.mxu0 0.0
    %1045 = vmatpush1.msra.mxu0 %v1008
    %1046 = vmatprep.subr.mxu0 0.0
    %1047 = vmatpush1.msra.mxu0 %v1007
    %1048 = vmatprep.subr.mxu0 0.0
    %1049 = vmatpush1.msra.mxu0 %v1006
    %1050 = vmatprep.subr.mxu0 0.0
    %1051 = vmatpush2.msra.mxu0 0.0
    %1052 = vmatprep.subr.mxu0 0.0
    %1053 = vmatpush2.msra.mxu0 0.0
    %1054 = vmatprep.subr.mxu0 0.0
    %1055 = vmatpush2.msra.mxu0 0.0
    %1056 = vmatprep.subr.mxu0 0.0
    %1057 = vmatpush2.msra.mxu0 0.0
    %1058 = vmatprep.subr.mxu0 0.0
    %1059 = vmatpush2.msra.mxu0 0.0
    %1060 = vmatprep.subr.mxu0 0.0
    %1061 = vmatpush2.msra.mxu0 0.0
    %1062 = vmatprep.subr.mxu0 0.0
    %1063 = vmatpush2.msra.mxu0 0.0
    %1064 = vmatprep.subr.mxu0 0.0
    %1065 = vmatpush2.msra.mxu0 0.0
    %1066 = vmatprep.subr.mxu0 0.0
    %1067 = vmatpush2.msra.mxu0 0.0
    %1068 = vmatprep.subr.mxu0 0.0
    %1069 = vmatpush2.msra.mxu0 0.0
    %1070 = vmatprep.subr.mxu0 0.0
    %1071 = vmatpush2.msra.mxu0 0.0
    %1072 = vmatprep.subr.mxu0 0.0
    %1073 = vmatpush2.msra.mxu0 0.0
    %1074 = vmatprep.subr.mxu0 0.0
    %1075 = vmatpush2.msra.mxu0 0.0
    %1076 = vmatprep.subr.mxu0 0.0
    %1077 = vmatpush2.msra.mxu0 0.0
    %1078 = vmatprep.subr.mxu0 0.0
    %1079 = vmatpush2.msra.mxu0 0.0
    %1080 = vmatprep.subr.mxu0 0.0
    %1081 = vmatpush2.msra.mxu0 0.0
    %1082 = vmatprep.mubr.f32.mxu0 0.0
    %1083 = vmatmul.mubr.f32.gmra.mxu0 %v1016
    %v1084 = vpop.f32.mrf.mxu0
    %v1085 = vadd.f32 0.0, %v1084
    %v1086 = vpop.f32.mrf.mxu0
    %1087 = vdwg.mxu0
    %1088 = vmatprep.subr.mxu0 0.0
    %1089 = vmatpush1.msra.mxu0 0.0
    %1090 = vmatprep.subr.mxu0 0.0
    %1091 = vmatpush1.msra.mxu0 0.0
    %1092 = vmatprep.subr.mxu0 0.0
    %1093 = vmatpush1.msra.mxu0 0.0
    %1094 = vmatprep.subr.mxu0 0.0
    %1095 = vmatpush1.msra.mxu0 0.0
    %1096 = vmatprep.subr.mxu0 0.0
    %1097 = vmatpush1.msra.mxu0 0.0
    %1098 = vmatprep.subr.mxu0 0.0
    %1099 = vmatpush1.msra.mxu0 0.0
    %1100 = vmatprep.subr.mxu0 0.0
    %1101 = vmatpush1.msra.mxu0 0.0
    %1102 = vmatprep.subr.mxu0 0.0
    %1103 = vmatpush1.msra.mxu0 0.0
    %1104 = vmatprep.subr.mxu0 0.0
    %1105 = vmatpush1.msra.mxu0 0.0
    %1106 = vmatprep.subr.mxu0 0.0
    %1107 = vmatpush1.msra.mxu0 0.0
    %1108 = vmatprep.subr.mxu0 0.0
    %1109 = vmatpush1.msra.mxu0 0.0
    %1110 = vmatprep.subr.mxu0 0.0
    %1111 = vmatpush1.msra.mxu0 0.0
    %1112 = vmatprep.subr.mxu0 0.0
    %1113 = vmatpush1.msra.mxu0 %v1013
    %1114 = vmatprep.subr.mxu0 0.0
    %1115 = vmatpush1.msra.mxu0 %v1012
    %1116 = vmatprep.subr.mxu0 0.0
    %1117 = vmatpush1.msra.mxu0 %v1011
    %1118 = vmatprep.subr.mxu0 0.0
    %1119 = vmatpush1.msra.mxu0 %v1010
    %1120 = vmatprep.subr.mxu0 0.0
    %1121 = vmatpush2.msra.mxu0 0.0
    %1122 = vmatprep.subr.mxu0 0.0
    %1123 = vmatpush2.msra.mxu0 0.0
    %1124 = vmatprep.subr.mxu0 0.0
    %1125 = vmatpush2.msra.mxu0 0.0
    %1126 = vmatprep.subr.mxu0 0.0
    %1127 = vmatpush2.msra.mxu0 0.0
    %1128 = vmatprep.subr.mxu0 0.0
    %1129 = vmatpush2.msra.mxu0 0.0
    %1130 = vmatprep.subr.mxu0 0.0
    %1131 = vmatpush2.msra.mxu0 0.0
    %1132 = vmatprep.subr.mxu0 0.0
    %1133 = vmatpush2.msra.mxu0 0.0
    %1134 = vmatprep.subr.mxu0 0.0
    %1135 = vmatpush2.msra.mxu0 0.0
    %1136 = vmatprep.subr.mxu0 0.0
    %1137 = vmatpush2.msra.mxu0 0.0
    %1138 = vmatprep.subr.mxu0 0.0
    %1139 = vmatpush2.msra.mxu0 0.0
    %1140 = vmatprep.subr.mxu0 0.0
    %1141 = vmatpush2.msra.mxu0 0.0
    %1142 = vmatprep.subr.mxu0 0.0
    %1143 = vmatpush2.msra.mxu0 0.0
    %1144 = vmatprep.subr.mxu0 0.0
    %1145 = vmatpush2.msra.mxu0 0.0
    %1146 = vmatprep.subr.mxu0 0.0
    %1147 = vmatpush2.msra.mxu0 0.0
    %1148 = vmatprep.subr.mxu0 0.0
    %1149 = vmatpush2.msra.mxu0 0.0
    %1150 = vmatprep.subr.mxu0 0.0
    %1151 = vmatpush2.msra.mxu0 0.0
    %1152 = vmatprep.mubr.f32.mxu0 0.0
    %1153 = vmatmul.mubr.f32.gmra.mxu0 %v1016
    %v1154 = vpop.f32.mrf.mxu0
    %v1155 = vadd.f32 0.0, %v1154
    %v1156 = vpop.f32.mrf.mxu0
    %1157 = vdwg.mxu0
    %v1159 = vrot.slane %v1155, 2
    %v1161 = vadd.f32 %v1085, %v1159
    %v1163 = vlaneseq
    %v1164 = vshrl.u32 %v1163, 7
    %v1165 = vsub.s32 0, %v1164
    %v1166 = vrot.slane %v1005, %v1165
    %v1168 = vadd.f32 %v1161, %v1166
    %v1169 = vrot.slane %v1155, 6
    %v1171 = vadd.f32 %v1085, %v1169
    %v1172 = vadd.f32 %v1171, %v1166
    %v1173 = vsel %vm999, %v1168, %v1172
    %1174 = vst [vmem:[#allocation2] sm:$0xf] %v1173
    // Predicated region
    $region22: #{tpu_custom_call.1} parent=1 // pred_check
      _
    $region23: #{tpu_custom_call.1} parent=1 // pred_check_branch
      %1176 = sbr.rel (0) target = $region25
    $region24: #{tpu_custom_call.1} parent=1 // pred_region
      %s1178 = ssub.s32 64, 64
      %1179 = vsyncadd [#allocation3], %s1178
      %s1181 = sshll.u32 [#allocation2], 4
      %s1182 = int_to_ptr.vmem [resolvable:$true] %s1181
      %1184 = dma.vmem_to_hbm [thread:$0]  %s1182, 64, %s5, [#allocation3]
    $region25: #{tpu_custom_call.1} parent=1 // pred_fallthru
      _
    // Predicated region
    $region26: #{tpu_custom_call.1} parent=1 // pred_check
      _
    $region27: #{tpu_custom_call.1} parent=1 // pred_check_branch
      %1186 = sbr.rel (0) target = $region29
    $region28: #{tpu_custom_call.1} parent=1 // pred_region
      %1187 = dma.done [#allocation3], 64
    $region29: #{tpu_custom_call.1} parent=1 // pred_fallthru
      _
    %1188 = vsyncpa [#allocation3], 1

</llo_original>
